<compile_context>
chip_gen: v7x
topology: tpu7x:2x2x1
jax: 0.10.0
libtpu: 0.0.40
codegen_flags: <defaults>
</compile_context>

<pallas_src>
import functools

import jax
import jax.numpy as jnp
from jax import lax
from jax.experimental import pallas as pl
from jax.experimental.pallas import tpu as pltpu


# ---------------------------------------------------------------------------
# Generation-aware VMEM budgets
# ---------------------------------------------------------------------------

_FALLBACK_VMEM_CAPACITY = 64 * 1024 * 1024   # v7x physical = most conservative


@functools.lru_cache(maxsize=1)
def _vmem_capacity_bytes():
    try:
        cap = int(pltpu.get_tpu_info().vmem_capacity_bytes)
        if cap <= 0:
            raise ValueError("bad vmem capacity")
        return cap
    except Exception:  # no TPU / interpret mode / older jax: be conservative
        return _FALLBACK_VMEM_CAPACITY


def _vmem_plan_budget():
    # Budget used for tile planning; leaves headroom for double buffers we do
    # not model exactly and for compiler-internal scratch.
    return int(_vmem_capacity_bytes() * 0.70)


def _vmem_limit_bytes():
    return min(int(_vmem_capacity_bytes() * 0.85), 100 * 1024 * 1024)


# ---------------------------------------------------------------------------
# Tiling helpers (plain Python)
# ---------------------------------------------------------------------------

def _cdiv(a, b):
    return -(-a // b)


def _round_up(x, m):
    return ((x + m - 1) // m) * m


def _pad2d(f, rows, cols):
    r, c = f.shape
    if r == rows and c == cols:
        return f
    return jnp.pad(f, ((0, rows - r), (0, cols - c)))


def _split_k(k, tk_cap):
    """Pad K to a multiple of 128 and split into equal 128-aligned tiles."""
    kp128 = _round_up(k, 128)
    tk_cap = max(128, (tk_cap // 128) * 128)
    nk = _cdiv(kp128, tk_cap)
    tk = _round_up(_cdiv(kp128, nk), 128)
    return tk, nk * tk, nk


def _plan_resident(m, k, itemsize):
    """Resident (Mp, Mp) accumulator plan, or None if it doesn't fit VMEM."""
    budget = _vmem_plan_budget()
    mp = _round_up(m, 8) if m <= 128 else _round_up(m, 128)
    fixed = 3 * mp * mp * 4                  # acc scratch + target gram buffers
    min_panels = 2 * mp * 128 * itemsize     # double-buffered (mp, 128) panel
    if fixed + min_panels > budget:
        return None
    tk_cap = (budget - fixed) // (2 * mp * itemsize)
    tk, kp, nk = _split_k(k, tk_cap)
    row_chunk = min(mp, 128)
    return dict(mp=mp, tk=tk, kp=kp, nk=nk,
                row_chunk=row_chunk, n_chunks=mp // row_chunk)


def _plan_tiled(m, k, itemsize):
    """Fallback plan: (tm, tm) output tiles over an upper-triangular schedule."""
    budget = _vmem_plan_budget()
    tm = 256 if m > 256 else _round_up(m, 8)   # 256 fills the v6e/v7x MXU
    mp = _round_up(m, tm)
    fixed = 3 * tm * tm * 4                    # acc scratch + target tile bufs
    avail = max(budget - fixed, 2 * 2 * tm * 128 * itemsize)
    tk_cap = avail // (2 * 2 * tm * itemsize)  # two (tm, tk) inputs, 2 buffers
    tk, kp, nk = _split_k(k, tk_cap)
    row_chunk = min(tm, 128)
    return dict(tm=tm, mp=mp, tk=tk, kp=kp, nk=nk,
                row_chunk=row_chunk, n_chunks=tm // row_chunk)


def _gram_plan(m, k, itemsize, force_tiled=False):
    plan = None if force_tiled else _plan_resident(m, k, itemsize)
    if plan is not None:
        return "resident", plan
    return "tiled", _plan_tiled(m, k, itemsize)


# ---------------------------------------------------------------------------
# Resident-accumulator kernels (primary path)
# ---------------------------------------------------------------------------

def _gram_resident_kernel(f_ref, g_ref, *, inv_denom):
    k = pl.program_id(0)

    @pl.when(k == 0)
    def _():
        g_ref[...] = jnp.zeros_like(g_ref)

    # Contract the (Mp, tk) panel with itself over the last dim (no transpose).
    f = f_ref[...]
    g_ref[...] += lax.dot_general(
        f, f, dimension_numbers=(((1,), (1,)), ((), ())),
        preferred_element_type=jnp.float32)

    @pl.when(k == pl.num_programs(0) - 1)
    def _():
        g_ref[...] = g_ref[...] * inv_denom


def _gram_resident(f, *, denom, plan):
    mp, tk, kp, nk = plan["mp"], plan["tk"], plan["kp"], plan["nk"]
    fpad = _pad2d(f, mp, kp)
    itemsize = fpad.dtype.itemsize
    cost = pl.CostEstimate(
        flops=2 * mp * mp * kp, transcendentals=0,
        bytes_accessed=mp * kp * itemsize + mp * mp * 4)
    return pl.pallas_call(
        functools.partial(_gram_resident_kernel, inv_denom=1.0 / denom),
        out_shape=jax.ShapeDtypeStruct((mp, mp), jnp.float32),
        grid=(nk,),
        in_specs=[pl.BlockSpec((mp, tk), lambda k: (0, k))],
        out_specs=pl.BlockSpec((mp, mp), lambda k: (0, 0)),
        compiler_params=pltpu.CompilerParams(
            dimension_semantics=("arbitrary",),
            vmem_limit_bytes=_vmem_limit_bytes()),
        cost_estimate=cost,
    )(fpad)


def _style_loss_resident_kernel(f_ref, tgt_ref, loss_ref, acc_ref, *,
                                inv_denom, mse_scale, row_chunk, n_chunks):
    k = pl.program_id(0)

    @pl.when(k == 0)
    def _():
        acc_ref[...] = jnp.zeros_like(acc_ref)

    f = f_ref[...]
    acc_ref[...] += lax.dot_general(
        f, f, dimension_numbers=(((1,), (1,)), ((), ())),
        preferred_element_type=jnp.float32)

    @pl.when(k == pl.num_programs(0) - 1)
    def _():
        # Chunked finalize: keep live (row_chunk, Mp) temporaries small.
        def body(i, s):
            r0 = i * row_chunk
            g = acc_ref[pl.ds(r0, row_chunk), :] * inv_denom
            d = g - tgt_ref[pl.ds(r0, row_chunk), :]
            return s + jnp.sum(d * d)

        total = lax.fori_loop(0, n_chunks, body, jnp.float32(0.0), unroll=True)
        loss_ref[0, 0] = total * mse_scale


def _style_loss_resident(f, target_padded, *, m, denom, plan):
    mp, tk, kp, nk = plan["mp"], plan["tk"], plan["kp"], plan["nk"]
    fpad = _pad2d(f, mp, kp)
    itemsize = fpad.dtype.itemsize
    cost = pl.CostEstimate(
        flops=2 * mp * mp * kp, transcendentals=0,
        bytes_accessed=mp * kp * itemsize + mp * mp * 4 + 4)
    kernel = functools.partial(
        _style_loss_resident_kernel,
        inv_denom=1.0 / denom, mse_scale=1.0 / float(m * m),
        row_chunk=plan["row_chunk"], n_chunks=plan["n_chunks"])
    loss = pl.pallas_call(
        kernel,
        out_shape=jax.ShapeDtypeStruct((1, 1), jnp.float32),
        grid=(nk,),
        in_specs=[pl.BlockSpec((mp, tk), lambda k: (0, k)),
                  pl.BlockSpec((mp, mp), lambda k: (0, 0))],
        out_specs=pl.BlockSpec(memory_space=pltpu.MemorySpace.SMEM),
        scratch_shapes=[pltpu.VMEM((mp, mp), jnp.float32)],
        compiler_params=pltpu.CompilerParams(
            dimension_semantics=("arbitrary",),
            vmem_limit_bytes=_vmem_limit_bytes()),
        cost_estimate=cost,
    )(fpad, target_padded)
    return loss[0, 0]


# ---------------------------------------------------------------------------
# Tiled fallback kernels (large M: Mp x Mp accumulator would not fit VMEM)
# ---------------------------------------------------------------------------

def _gram_tiled_kernel(lhs_ref, rhs_ref, g_ref, acc_ref, *, inv_denom):
    k = pl.program_id(2)

    @pl.when(k == 0)
    def _():
        acc_ref[...] = jnp.zeros_like(acc_ref)

    acc_ref[...] += lax.dot_general(
        lhs_ref[...], rhs_ref[...],
        dimension_numbers=(((1,), (1,)), ((), ())),
        preferred_element_type=jnp.float32)

    @pl.when(k == pl.num_programs(2) - 1)
    def _():
        g_ref[...] = acc_ref[...] * inv_denom


def _gram_tiled(f, *, denom, plan):
    tm, mp, tk, kp, nk = (plan["tm"], plan["mp"], plan["tk"],
                          plan["kp"], plan["nk"])
    fpad = _pad2d(f, mp, kp)
    gm = mp // tm
    itemsize = fpad.dtype.itemsize
    cost = pl.CostEstimate(
        flops=2 * mp * mp * kp, transcendentals=0,
        bytes_accessed=2 * gm * mp * kp * itemsize + mp * mp * 4)
    return pl.pallas_call(
        functools.partial(_gram_tiled_kernel, inv_denom=1.0 / denom),
        out_shape=jax.ShapeDtypeStruct((mp, mp), jnp.float32),
        grid=(gm, gm, nk),
        in_specs=[pl.BlockSpec((tm, tk), lambda i, j, k: (i, k)),
                  pl.BlockSpec((tm, tk), lambda i, j, k: (j, k))],
        out_specs=pl.BlockSpec((tm, tm), lambda i, j, k: (i, j)),
        scratch_shapes=[pltpu.VMEM((tm, tm), jnp.float32)],
        compiler_params=pltpu.CompilerParams(
            dimension_semantics=("parallel", "parallel", "arbitrary"),
            vmem_limit_bytes=_vmem_limit_bytes()),
        cost_estimate=cost,
    )(fpad, fpad)


def _style_loss_tiled_kernel(i_map_ref, j_map_ref,          # scalar prefetch
                             lhs_ref, rhs_ref, tgt_ref,     # VMEM tiles
                             loss_ref,                      # SMEM scalar out
                             acc_ref,                       # VMEM f32 scratch
                             *, inv_denom, mse_scale, row_chunk, n_chunks):
    # NOTE: all program ids / prefetch reads happen here, never inside pl.when.
    t = pl.program_id(0)
    k = pl.program_id(1)
    nk = pl.num_programs(1)
    # Gram is symmetric: off-diagonal tiles stand in for their mirror image
    # too (weight 2); diagonal tiles count once.
    weight = jnp.where(i_map_ref[t] == j_map_ref[t], 1.0, 2.0)

    @pl.when(jnp.logical_and(t == 0, k == 0))
    def _():
        loss_ref[0, 0] = jnp.float32(0.0)

    @pl.when(k == 0)
    def _():
        acc_ref[...] = jnp.zeros_like(acc_ref)

    acc_ref[...] += lax.dot_general(
        lhs_ref[...], rhs_ref[...],
        dimension_numbers=(((1,), (1,)), ((), ())),
        preferred_element_type=jnp.float32)

    @pl.when(k == nk - 1)
    def _():
        def body(i, s):
            r0 = i * row_chunk
            g = acc_ref[pl.ds(r0, row_chunk), :] * inv_denom
            d = g - tgt_ref[pl.ds(r0, row_chunk), :]
            return s + jnp.sum(d * d)

        tile_sum = lax.fori_loop(0, n_chunks, body, jnp.float32(0.0),
                                 unroll=True)
        loss_ref[0, 0] = loss_ref[0, 0] + tile_sum * weight * mse_scale


def _style_loss_tiled(f, target_padded, *, m, denom, plan):
    tm, mp, tk, kp, nk = (plan["tm"], plan["mp"], plan["tk"],
                          plan["kp"], plan["nk"])
    fpad = _pad2d(f, mp, kp)
    gm = mp // tm

    # Upper-triangular output-tile schedule (symmetry halves MXU work).
    idx_i, idx_j = [], []
    for i in range(gm):
        for j in range(i, gm):
            idx_i.append(i)
            idx_j.append(j)
    n_tiles = len(idx_i)
    i_map = jnp.asarray(idx_i, dtype=jnp.int32)
    j_map = jnp.asarray(idx_j, dtype=jnp.int32)

    itemsize = fpad.dtype.itemsize
    cost = pl.CostEstimate(
        flops=2 * n_tiles * tm * tm * kp, transcendentals=0,
        bytes_accessed=n_tiles * (2 * tm * kp * itemsize + tm * tm * 4) + 4)

    kernel = functools.partial(
        _style_loss_tiled_kernel,
        inv_denom=1.0 / denom, mse_scale=1.0 / float(m * m),
        row_chunk=plan["row_chunk"], n_chunks=plan["n_chunks"])

    loss = pl.pallas_call(
        kernel,
        out_shape=jax.ShapeDtypeStruct((1, 1), jnp.float32),
        grid_spec=pltpu.PrefetchScalarGridSpec(
            num_scalar_prefetch=2,
            grid=(n_tiles, nk),
            in_specs=[
                pl.BlockSpec((tm, tk), lambda t, k, im, jm: (im[t], k)),
                pl.BlockSpec((tm, tk), lambda t, k, im, jm: (jm[t], k)),
                pl.BlockSpec((tm, tm), lambda t, k, im, jm: (im[t], jm[t])),
            ],
            out_specs=pl.BlockSpec(memory_space=pltpu.MemorySpace.SMEM),
            scratch_shapes=[pltpu.VMEM((tm, tm), jnp.float32)],
        ),
        compiler_params=pltpu.CompilerParams(
            # Loss accumulates into one SMEM scalar across tiles -> keep both
            # axes "arbitrary" (no cross-core race on the accumulator).
            dimension_semantics=("arbitrary", "arbitrary"),
            vmem_limit_bytes=_vmem_limit_bytes()),
        cost_estimate=cost,
    )(i_map, j_map, fpad, fpad, target_padded)
    return loss[0, 0]


# ---------------------------------------------------------------------------
# Public helpers / module
# ---------------------------------------------------------------------------

def _gram_padded(f, *, denom, kind, plan):
    if kind == "resident":
        return _gram_resident(f, denom=denom, plan=plan)
    return _gram_tiled(f, denom=denom, plan=plan)


def gram_matrix(x):
    """Pallas equivalent of the PyTorch gram_matrix helper. x: (N, C, H, W)."""
    n, c, h, w = x.shape
    m, k = n * c, h * w
    f = x.reshape(m, k)
    kind, plan = _gram_plan(m, k, f.dtype.itemsize)
    g = _gram_padded(f, denom=float(n * c * h * w), kind=kind, plan=plan)
    return g[:m, :m]


class StyleLoss:
    """JAX/Pallas port of the PyTorch StyleLoss module.

    __init__ stores gram(target_feature); __call__ computes
    loss = mse(gram(input_feature), target) and returns input_feature
    unchanged (matching the PyTorch forward semantics).

    NOTE: like the PyTorch module, `self.loss` is ordinary Python state; under
    jax.jit of a caller it becomes a traced value.
    """

    def __init__(self, target_feature, compute_dtype=None, force_tiled=False):
        n, c, h, w = target_feature.shape
        self._feature_shape = (n, c, h, w)
        self._m, self._k = n * c, h * w
        self._denom = float(n * c * h * w)
        # Optional bf16 feature cast halves F streaming traffic (review
        # suggestion); default None keeps reference-exact numerics.
        self._compute_dtype = compute_dtype

        f_t = self._prep(target_feature)
        self._kind, self._plan = _gram_plan(
            self._m, self._k, f_t.dtype.itemsize, force_tiled=force_tiled)

        # Padded target gram kept for the fused loss kernel; unpadded slice
        # exposed to match the PyTorch attribute.
        self._target_padded = _gram_padded(
            f_t, denom=self._denom, kind=self._kind, plan=self._plan)
        self.target = self._target_padded[: self._m, : self._m]
        self.loss = None

    def _prep(self, feature):
        f = feature.reshape(self._m, self._k)
        if self._compute_dtype is not None:
            f = f.astype(self._compute_dtype)
        return f

    def __call__(self, input_feature):
        assert input_feature.shape == self._feature_shape, (
            "input feature shape must match the target feature shape")
        f = self._prep(input_feature)
        if self._kind == "resident":
            self.loss = _style_loss_resident(
                f, self._target_padded,
                m=self._m, denom=self._denom, plan=self._plan)
        else:
            self.loss = _style_loss_tiled(
                f, self._target_padded,
                m=self._m, denom=self._denom, plan=self._plan)
        return input_feature

    # PyTorch-style alias
    forward = __call__


# ---------------------------------------------------------------------------
# Reference + self-test
# ---------------------------------------------------------------------------

def _ref_gram(x):
    n, c, h, w = x.shape
    f = x.reshape(n * c, h * w).astype(jnp.float32)
    return (f @ f.T) / (n * c * h * w)


if __name__ == "__main__":
    key = jax.random.PRNGKey(0)
    k_t, k_i = jax.random.split(key)

    # Small shapes consistent with the module: batch=2, channels=4, spatial=16.
    target_feature = jax.random.normal(k_t, (2, 4, 16, 16), dtype=jnp.float32)
    input_feature = jax.random.normal(k_i, (2, 4, 16, 16), dtype=jnp.float32)

    module = StyleLoss(target_feature)
    out = jax.block_until_ready(module(input_feature))
    loss = jax.block_until_ready(module.loss)

    # Pure-JAX reference.
    g_ref = _ref_gram(input_feature)
    t_ref = _ref_gram(target_feature)
    loss_ref = jnp.mean((g_ref - t_ref) ** 2)

    g_in = jax.block_until_ready(gram_matrix(input_feature))

    assert out.shape == input_feature.shape
    assert bool(jnp.allclose(out, input_feature))
    assert bool(jnp.allclose(module.target, t_ref, atol=1e-5, rtol=1e-5))
    assert bool(jnp.allclose(g_in, g_ref, atol=1e-5, rtol=1e-5))
    assert bool(jnp.allclose(loss, loss_ref, atol=1e-8, rtol=1e-3))

    # Also exercise the large-M fallback (upper-triangular tiled schedule) on
    # the same small shape by forcing it.
    module_tiled = StyleLoss(target_feature, force_tiled=True)
    module_tiled(input_feature)
    loss_tiled = jax.block_until_ready(module_tiled.loss)
    assert bool(jnp.allclose(module_tiled.target, t_ref, atol=1e-5, rtol=1e-5))
    assert bool(jnp.allclose(loss_tiled, loss_ref, atol=1e-8, rtol=1e-3))

    print("KERNEL_OK")
</pallas_src>

<mosaic_0001>
module attributes {stable_mosaic.version = 11 : i64} {
  func.func @_gram_resident_kernel(%arg0: i32, %arg1: memref<8x256xf32, #tpu.memory_space<vmem>>, %arg2: memref<8x8xf32, #tpu.memory_space<vmem>>) attributes {dimension_semantics = [#tpu.dimension_semantics<arbitrary>], iteration_bounds = array<i64: 1>, scalar_prefetch = 0 : i64, scratch_operands = 0 : i64, tpu.core_type = #tpu.core_type<tc>, window_params = [{transform_indices = @transform_0, window_bounds = array<i64: 8, 256>}, {pipeline_mode = #tpu.pipeline_mode<synchronous>, transform_indices = @transform_1, window_bounds = array<i64: 8, 8>}]} {
    %c0_i32 = arith.constant 0 : i32
    %0 = arith.cmpi eq, %arg0, %c0_i32 : i32
    %1 = arith.extui %0 : i1 to i32
    %c0_i32_0 = arith.constant 0 : i32
    %2 = arith.cmpi ne, %1, %c0_i32_0 : i32
    scf.if %2 {
      %cst_8 = arith.constant 0.000000e+00 : f32
      %11 = vector.broadcast %cst_8 : f32 to vector<8x8xf32>
      %c0_9 = arith.constant 0 : index
      %c0_10 = arith.constant 0 : index
      %12 = vector.load %arg2[%c0_9, %c0_10] : memref<8x8xf32, #tpu.memory_space<vmem>>, vector<8x8xf32>
      tpu.vector_store %arg2[%c0_9, %c0_10], %11 {strides = array<i32>} : memref<8x8xf32, #tpu.memory_space<vmem>>, vector<8x8xf32>,
    } else {
    }
    %c0 = arith.constant 0 : index
    %c0_1 = arith.constant 0 : index
    %3 = vector.load %arg1[%c0, %c0_1] : memref<8x256xf32, #tpu.memory_space<vmem>>, vector<8x256xf32>
    %c0_2 = arith.constant 0 : index
    %c0_3 = arith.constant 0 : index
    %4 = vector.load %arg2[%c0_2, %c0_3] : memref<8x8xf32, #tpu.memory_space<vmem>>, vector<8x8xf32>
    %cst = arith.constant dense<0.000000e+00> : vector<8x8xf32>
    %5 = tpu.matmul %3, %3, %cst {dimension_numbers = #tpu.dot_dimension_numbers<[1], [1], [0], [0], [0, 0, 1, 0], [], []>} : vector<8x256xf32>, vector<8x256xf32>, vector<8x8xf32> -> vector<8x8xf32>
    %6 = arith.addf %4, %5 : vector<8x8xf32>
    %c0_4 = arith.constant 0 : index
    %c0_5 = arith.constant 0 : index
    %7 = vector.load %arg2[%c0_4, %c0_5] : memref<8x8xf32, #tpu.memory_space<vmem>>, vector<8x8xf32>
    tpu.vector_store %arg2[%c0_4, %c0_5], %6 {strides = array<i32>} : memref<8x8xf32, #tpu.memory_space<vmem>>, vector<8x8xf32>,
    %c0_i32_6 = arith.constant 0 : i32
    %8 = arith.cmpi eq, %arg0, %c0_i32_6 : i32
    %9 = arith.extui %8 : i1 to i32
    %c0_i32_7 = arith.constant 0 : i32
    %10 = arith.cmpi ne, %9, %c0_i32_7 : i32
    scf.if %10 {
      %c0_8 = arith.constant 0 : index
      %c0_9 = arith.constant 0 : index
      %11 = vector.load %arg2[%c0_8, %c0_9] : memref<8x8xf32, #tpu.memory_space<vmem>>, vector<8x8xf32>
      %cst_10 = arith.constant 4.8828125E-4 : f32
      %12 = vector.broadcast %cst_10 : f32 to vector<8x8xf32>
      %13 = arith.mulf %11, %12 : vector<8x8xf32>
      %c0_11 = arith.constant 0 : index
      %c0_12 = arith.constant 0 : index
      %14 = vector.load %arg2[%c0_11, %c0_12] : memref<8x8xf32, #tpu.memory_space<vmem>>, vector<8x8xf32>
      tpu.vector_store %arg2[%c0_11, %c0_12], %13 {strides = array<i32>} : memref<8x8xf32, #tpu.memory_space<vmem>>, vector<8x8xf32>,
    } else {
    }
    return
  }
  func.func @transform_0(%arg0: i32) -> (i32, i32) {
    %c0_i32 = arith.constant 0 : i32
    %c0_i32_0 = arith.constant 0 : i32
    return %c0_i32, %arg0 : i32, i32
  }
  func.func @transform_1(%arg0: i32) -> (i32, i32) {
    %c0_i32 = arith.constant 0 : i32
    %c0_i32_0 = arith.constant 0 : i32
    %c0_i32_1 = arith.constant 0 : i32
    return %c0_i32, %c0_i32_0 : i32, i32
  }
}

</mosaic_0001>

<llo_original>
// kernel: tpu_custom_call.1
$region0: #{tpu_custom_call.1}
  #allocation0 [shape = 'u32[]', space=smem, size = 0x4, offset = 0x4, fixed_abs, tag = 'smem constant byte address 0x4 - core index']
  #allocation1 [shape = 'u32[144,128]{1,0:T(1,128)}', space=vmem, size = 0x12000, scoped, tag = 'internal scratch']
  %s0 = inlined_call_operand.hbm [shape: f32[8,256], index: 0, kind: input, shape index: {}]
  %s1 = inlined_call_operand.hbm [shape: f32[8,8], index: 1, kind: output, shape index: {}]
  %s2 = sld [smem:[#allocation0]]
  $region26: #{tpu_custom_call.1} parent=0
    _
  %s4 = ssub.s32 1, %s2
  %s5 = scalar_select 0, %s4, %s2
  $region1: #{tpu_custom_call.1} parent=0
    #allocation2 [shape = 'u8[8192]{0}', space=vmem, size = 0x2000, scoped, tag = 'input window, operand 0, single buffered']
    #allocation3 [shape = 's32[1]{0}', space=sflag, size = 0x4, scoped, tag = 'scoped memory for tpu_custom_call.1']
    #allocation4 [shape = 's32[1]{0}', space=sflag, size = 0x4, scoped, tag = 'scoped memory for tpu_custom_call.1']
    #allocation5 [shape = 'u8[4096]{0}', space=vmem, size = 0x1000, scoped, tag = 'output window, operand 0, single buffered']
    %6 = vsyncpa [#allocation3], 0
    %7 = vsyncpa [#allocation4], 0
    // Predicated region
    $region2: #{tpu_custom_call.1} parent=1 // pred_check
      _
    $region3: #{tpu_custom_call.1} parent=1 // pred_check_branch
      %9 = sbr.rel (0) target = $region5
    $region4: #{tpu_custom_call.1} parent=1 // pred_region
      %s11 = ssub.s32 256, 256
      %12 = vsyncadd [#allocation3], %s11
      %s14 = sshll.u32 [#allocation2], 4
      %s15 = int_to_ptr.vmem [resolvable:$true] %s14
      %17 = dma.hbm_to_vmem [thread:$0]  %s0, 256, %s15, [#allocation3]
    $region5: #{tpu_custom_call.1} parent=1 // pred_fallthru
      _
    // Predicated region
    $region6: #{tpu_custom_call.1} parent=1 // pred_check
      _
    $region7: #{tpu_custom_call.1} parent=1 // pred_check_branch
      %19 = sbr.rel (0) target = $region9
    $region8: #{tpu_custom_call.1} parent=1 // pred_region
      %20 = dma.done [#allocation3], 256
    $region9: #{tpu_custom_call.1} parent=1 // pred_fallthru
      _
    %p21 = scmp.eq.s32.totalorder 0, 0
    // Predicated region
    $region10: #{tpu_custom_call.1} parent=1 // pred_check
      %p22 = pneg %p21
    $region11: #{tpu_custom_call.1} parent=1 // pred_check_branch
      %24 = sbr.rel (%p22) target = $region13
    $region12: #{tpu_custom_call.1} parent=1 // pred_region
      %vm25 = vcmask 64512
      %26 = vst.msk [vmem:[#allocation5] sm:$0xff] %vm25, 0.0
    $region13: #{tpu_custom_call.1} parent=1 // pred_fallthru
      _
    %v27 = vld [vmem:[#allocation2] sm:$0xff]
    %v28 = vld [vmem:[#allocation2 + $0x8] sm:$0xff]
    %v29 = vld [vmem:[#allocation5] sm:$0xff]
    %30 = vmatprep.subr.mxu0 %v28
    %31 = vmatpush1.xpose.msra.mxu0 %v27
    %32 = vmatprep.subr.mxu0 0.0
    %33 = vmatpush1.xpose.msra.mxu0 0.0
    %34 = vmatprep.subr.mxu0 0.0
    %35 = vmatpush1.xpose.msra.mxu0 0.0
    %36 = vmatprep.subr.mxu0 0.0
    %37 = vmatpush1.xpose.msra.mxu0 0.0
    %38 = vmatprep.subr.mxu0 0.0
    %39 = vmatpush1.xpose.msra.mxu0 0.0
    %40 = vmatprep.subr.mxu0 0.0
    %41 = vmatpush1.xpose.msra.mxu0 0.0
    %42 = vmatprep.subr.mxu0 0.0
    %43 = vmatpush1.xpose.msra.mxu0 0.0
    %44 = vmatprep.subr.mxu0 0.0
    %45 = vmatpush1.xpose.msra.mxu0 0.0
    %46 = vmatprep.subr.mxu0 0.0
    %47 = vmatpush1.xpose.msra.mxu0 0.0
    %48 = vmatprep.subr.mxu0 0.0
    %49 = vmatpush1.xpose.msra.mxu0 0.0
    %50 = vmatprep.subr.mxu0 0.0
    %51 = vmatpush1.xpose.msra.mxu0 0.0
    %52 = vmatprep.subr.mxu0 0.0
    %53 = vmatpush1.xpose.msra.mxu0 0.0
    %54 = vmatprep.subr.mxu0 0.0
    %55 = vmatpush1.xpose.msra.mxu0 0.0
    %56 = vmatprep.subr.mxu0 0.0
    %57 = vmatpush1.xpose.msra.mxu0 0.0
    %58 = vmatprep.subr.mxu0 0.0
    %59 = vmatpush1.xpose.msra.mxu0 0.0
    %60 = vmatprep.subr.mxu0 0.0
    %61 = vmatpush1.xpose.msra.mxu0 0.0
    %62 = vmatprep.subr.mxu0 0.0
    %63 = vmatpush1.xpose.msra.mxu0 0.0
    %64 = vmatprep.subr.mxu0 0.0
    %65 = vmatpush1.xpose.msra.mxu0 0.0
    %66 = vmatprep.subr.mxu0 0.0
    %67 = vmatpush1.xpose.msra.mxu0 0.0
    %68 = vmatprep.subr.mxu0 0.0
    %69 = vmatpush1.xpose.msra.mxu0 0.0
    %70 = vmatprep.subr.mxu0 0.0
    %71 = vmatpush1.xpose.msra.mxu0 0.0
    %72 = vmatprep.subr.mxu0 0.0
    %73 = vmatpush1.xpose.msra.mxu0 0.0
    %74 = vmatprep.subr.mxu0 0.0
    %75 = vmatpush1.xpose.msra.mxu0 0.0
    %76 = vmatprep.subr.mxu0 0.0
    %77 = vmatpush1.xpose.msra.mxu0 0.0
    %78 = vmatprep.subr.mxu0 0.0
    %79 = vmatpush1.xpose.msra.mxu0 0.0
    %80 = vmatprep.subr.mxu0 0.0
    %81 = vmatpush1.xpose.msra.mxu0 0.0
    %82 = vmatprep.subr.mxu0 0.0
    %83 = vmatpush1.xpose.msra.mxu0 0.0
    %84 = vmatprep.subr.mxu0 0.0
    %85 = vmatpush1.xpose.msra.mxu0 0.0
    %86 = vmatprep.subr.mxu0 0.0
    %87 = vmatpush1.xpose.msra.mxu0 0.0
    %88 = vmatprep.subr.mxu0 0.0
    %89 = vmatpush1.xpose.msra.mxu0 0.0
    %90 = vmatprep.subr.mxu0 0.0
    %91 = vmatpush1.xpose.msra.mxu0 0.0
    %92 = vmatprep.subr.mxu0 0.0
    %93 = vmatpush1.xpose.msra.mxu0 0.0
    %94 = vmatprep.mubr.f32.mxu0 %v28
    %95 = vmatmul.mubr.f32.gmra.mrb[0].mxu0 %v27
    %v96 = vpop.f32.mrb[0].mxu0
    %v97 = vadd.f32 0.0, %v96
    %v98 = vpop.f32.mrb[0].mxu0
    %99 = vdwg.mxu0
    %v100 = vadd.f32 %v29, %v97
    %vm101 = vcmask 64512
    %102 = vst.msk [vmem:[#allocation5] sm:$0xff] %vm101, %v100
    // Predicated region
    $region14: #{tpu_custom_call.1} parent=1 // pred_check
      %p103 = pneg %p21
    $region15: #{tpu_custom_call.1} parent=1 // pred_check_branch
      %105 = sbr.rel (%p103) target = $region17
    $region16: #{tpu_custom_call.1} parent=1 // pred_region
      %v106 = vld [vmem:[#allocation5] sm:$0xff]
      %v107 = vmul.f32 %v106, 0.00048828125
      %108 = vst.msk [vmem:[#allocation5] sm:$0xff] %vm101, %v107
    $region17: #{tpu_custom_call.1} parent=1 // pred_fallthru
      _
    // Predicated region
    $region18: #{tpu_custom_call.1} parent=1 // pred_check
      _
    $region19: #{tpu_custom_call.1} parent=1 // pred_check_branch
      %110 = sbr.rel (0) target = $region21
    $region20: #{tpu_custom_call.1} parent=1 // pred_region
      %s112 = ssub.s32 128, 128
      %113 = vsyncadd [#allocation4], %s112
      %s115 = sshll.u32 [#allocation5], 4
      %s116 = int_to_ptr.vmem [resolvable:$true] %s115
      %118 = dma.vmem_to_hbm [thread:$0]  %s116, 128, %s1, [#allocation4]
    $region21: #{tpu_custom_call.1} parent=1 // pred_fallthru
      _
    // Predicated region
    $region22: #{tpu_custom_call.1} parent=1 // pred_check
      _
    $region23: #{tpu_custom_call.1} parent=1 // pred_check_branch
      %120 = sbr.rel (0) target = $region25
    $region24: #{tpu_custom_call.1} parent=1 // pred_region
      %121 = dma.done [#allocation4], 128
    $region25: #{tpu_custom_call.1} parent=1 // pred_fallthru
      _
    %122 = vsyncpa [#allocation3], 1
    %123 = vsyncpa [#allocation4], 1

</llo_original>
